<compile_context>
chip_gen: v5e
topology: v5e:2x2
jax: 0.10.0
libtpu: 0.0.40
codegen_flags: <defaults>
</compile_context>

<pallas_src>
import jax
import jax.numpy as jnp
from jax.experimental import pallas as pl
from jax.experimental.pallas import tpu as pltpu


def _scale_kernel(w_ref, x_ref, o_ref):
    # w_ref: (1,) scalar weight in SMEM (scalar prefetch); x/o: (tm, lanes) VMEM tiles.
    o_ref[...] = x_ref[...].astype(o_ref.dtype) * w_ref[0]


def _vmem_limit_bytes() -> int:
    """Explicit scoped-VMEM limit: ~75% of physical, capped at 64 MiB.

    v5e/v6e (128 MiB physical) -> 64 MiB; v7x (64 MiB physical) -> 48 MiB.
    """
    cap = 128 * 1024 * 1024
    try:
        info = pltpu.get_tpu_info()
        cap = int(getattr(info, "vmem_capacity_bytes", cap))
    except Exception:
        pass
    return min((cap * 3) // 4, 64 * 1024 * 1024)


def _choose_layout(total: int):
    """Pick the widest lane width in {2048..128} that divides total (no padding needed).

    Falls back to lanes=128 with minimal padding only when total % 128 != 0.
    """
    for lanes in (2048, 1024, 512, 256, 128):
        if total % lanes == 0:
            return lanes, 0
    lanes = 128
    padded = pl.cdiv(total, lanes) * lanes
    return lanes, padded - total


def _choose_tm(rows: int, lanes: int, in_item: int, out_item: int, budget_bytes: int) -> int:
    """Row tile: multiple of 32 rows, double-buffered in+out tiles within `budget_bytes`,
    and >= 4 (even) grid steps for tensors worth tiling (megacore + pipelining)."""
    pack = 32  # rows per full sublane group for f32/bf16/int8 -> unmasked vst
    per_row = 2 * lanes * (in_item + out_item)  # 2x(in) + 2x(out) double buffers
    max_tm = max(pack, (budget_bytes // per_row // pack) * pack)
    array_bytes = rows * lanes * (in_item + out_item)
    if rows <= max_tm and (array_bytes <= (4 << 20) or rows < 4 * pack):
        return rows  # small tensor: single full-extent block (always a legal block shape)
    steps = max(4, pl.cdiv(rows, max_tm))  # >= 2 steps per TensorCore on v7x
    if steps % 2:
        steps += 1  # even grid length: both cores get equal work
    tm = pl.cdiv(pl.cdiv(rows, steps), pack) * pack
    return max(pack, min(tm, max_tm, rows))


def module_of_user_forward(x: jax.Array, weight: jax.Array) -> jax.Array:
    """Pallas equivalent of `input_ * self.weight` (weight shape [1])."""
    orig_shape = x.shape
    out_dtype = jnp.result_type(x.dtype, weight.dtype)  # match torch type promotion
    total = int(x.size)
    in_item = jnp.dtype(x.dtype).itemsize
    out_item = jnp.dtype(out_dtype).itemsize

    w = weight.astype(out_dtype).reshape((1,))

    # --- lane-dense 2D layout; pad only when no lane width divides the size ---------
    lanes, pad = _choose_layout(total)
    flat = x.reshape(-1)
    if pad:
        flat = jnp.pad(flat, (0, pad))  # rare path (total % 128 != 0)
    rows = (total + pad) // lanes

    vmem_limit = _vmem_limit_bytes()
    tm = _choose_tm(rows, lanes, in_item, out_item, budget_bytes=vmem_limit // 2)
    grid = (pl.cdiv(rows, tm),)  # ragged last block is fine (masked writes, elementwise op)

    x2d = flat.reshape(rows, lanes)

    out2d = pl.pallas_call(
        _scale_kernel,
        out_shape=jax.ShapeDtypeStruct((rows, lanes), out_dtype),
        grid_spec=pltpu.PrefetchScalarGridSpec(
            num_scalar_prefetch=1,  # weight -> SMEM, handed to kernel + index_maps
            grid=grid,
            in_specs=[
                pl.BlockSpec((tm, lanes), lambda i, w_ref: (i, 0)),
            ],
            out_specs=pl.BlockSpec((tm, lanes), lambda i, w_ref: (i, 0)),
        ),
        compiler_params=pltpu.CompilerParams(
            dimension_semantics=("parallel",),  # shards row tiles across TCs on v7x
            vmem_limit_bytes=vmem_limit,
        ),
        cost_estimate=pl.CostEstimate(
            flops=total,
            transcendentals=0,
            bytes_accessed=total * (in_item + out_item),
        ),
    )(w, x2d)

    if pad:
        return out2d.reshape(-1)[:total].reshape(orig_shape)
    return out2d.reshape(orig_shape)


if __name__ == "__main__":
    key = jax.random.PRNGKey(0)

    # 1) Small NCHW input consistent with the module's arbitrary-tensor elementwise op.
    x = jax.random.normal(key, (2, 4, 16, 16), dtype=jnp.float32)
    weight = jnp.ones((1,), dtype=jnp.float32)  # torch.ones([1])
    y = module_of_user_forward(x, weight)
    jax.block_until_ready(y)
    ref = x * weight[0]
    assert y.shape == x.shape and y.dtype == ref.dtype
    assert jnp.allclose(y, ref), "mismatch vs reference"

    # 2) Padding path: element count not a multiple of 128.
    x_odd = jax.random.normal(jax.random.PRNGKey(1), (3, 5, 7), dtype=jnp.float32)
    y_odd = module_of_user_forward(x_odd, weight * 2.0)
    jax.block_until_ready(y_odd)
    assert jnp.allclose(y_odd, x_odd * 2.0), "mismatch vs reference (padded path)"

    # 3) Multi-step grid + ragged last row-block (no padding, masked tail writes).
    x_big = jax.random.normal(jax.random.PRNGKey(2), (300, 2048), dtype=jnp.float32)
    y_big = module_of_user_forward(x_big, weight * 0.5)
    jax.block_until_ready(y_big)
    assert jnp.allclose(y_big, x_big * 0.5), "mismatch vs reference (multi-block path)"

    # 4) Dtype promotion matches torch (bf16 input * f32 weight -> f32 output).
    x_bf16 = jax.random.normal(jax.random.PRNGKey(3), (4, 64), dtype=jnp.bfloat16)
    y_bf16 = module_of_user_forward(x_bf16, weight * 3.0)
    jax.block_until_ready(y_bf16)
    assert y_bf16.dtype == jnp.float32
    assert jnp.allclose(y_bf16, x_bf16.astype(jnp.float32) * 3.0), "mismatch (promotion path)"

    print("KERNEL_OK")
</pallas_src>

<mosaic_0001>
module attributes {stable_mosaic.version = 11 : i64} {
  func.func @_scale_kernel(%arg0: i32, %arg1: memref<1xf32, #tpu.memory_space<smem>>, %arg2: memref<1x2048xf32, #tpu.memory_space<vmem>>, %arg3: memref<1x2048xf32, #tpu.memory_space<vmem>>) attributes {dimension_semantics = [#tpu.dimension_semantics<parallel>], iteration_bounds = array<i64: 1>, scalar_prefetch = 1 : i64, scratch_operands = 0 : i64, tpu.core_type = #tpu.core_type<tc>, window_params = [{transform_indices = @transform_0, window_bounds = array<i64: 1, 2048>}, {transform_indices = @transform_1, window_bounds = array<i64: 1, 2048>}]} {
    %c0 = arith.constant 0 : index
    %c0_0 = arith.constant 0 : index
    %0 = vector.load %arg2[%c0, %c0_0] : memref<1x2048xf32, #tpu.memory_space<vmem>>, vector<1x2048xf32>
    %c0_1 = arith.constant 0 : index
    %1 = memref.load %arg1[%c0_1] : memref<1xf32, #tpu.memory_space<smem>>
    %2 = vector.broadcast %1 : f32 to vector<1x2048xf32>
    %3 = arith.mulf %0, %2 : vector<1x2048xf32>
    %c0_2 = arith.constant 0 : index
    %c0_3 = arith.constant 0 : index
    %4 = vector.load %arg3[%c0_2, %c0_3] : memref<1x2048xf32, #tpu.memory_space<vmem>>, vector<1x2048xf32>
    tpu.vector_store %arg3[%c0_2, %c0_3], %3 {strides = array<i32>} : memref<1x2048xf32, #tpu.memory_space<vmem>>, vector<1x2048xf32>,
    return
  }
  func.func @transform_0(%arg0: i32, %arg1: memref<1xf32, #tpu.memory_space<smem>>) -> (i32, i32) {
    %c0_i32 = arith.constant 0 : i32
    %c0_i32_0 = arith.constant 0 : i32
    return %arg0, %c0_i32 : i32, i32
  }
  func.func @transform_1(%arg0: i32, %arg1: memref<1xf32, #tpu.memory_space<smem>>) -> (i32, i32) {
    %c0_i32 = arith.constant 0 : i32
    %c0_i32_0 = arith.constant 0 : i32
    return %arg0, %c0_i32 : i32, i32
  }
}

</mosaic_0001>

<llo_original>
// kernel: tpu_custom_call.1
$region0: #{tpu_custom_call.1}
  #allocation0 [shape = 'u32[]', space=smem, size = 0x4, offset = 0x4, fixed_abs, tag = 'smem constant byte address 0x4 - core index']
  #allocation1 [shape = 'u32[72,128]{1,0:T(1,128)}', space=vmem, size = 0x9000, scoped, tag = 'internal scratch']
  #allocation2 [shape = 's32[1]{0}', space=sflag, size = 0x4, scoped, tag = 'scoped memory for tpu_custom_call.1']
  #allocation3 [shape = 'f32[1]{0:T(128)S(6)}', space=smem, size = 0x200, scoped, tag = 'prefetched SMEM operand 0']
  %s0 = inlined_call_operand.<no memory space> [shape: f32[1], index: 0, kind: input, shape index: {}]
  %s1 = inlined_call_operand.hbm [shape: f32[1,2048], index: 1, kind: input, shape index: {}]
  %s2 = inlined_call_operand.hbm [shape: f32[1,2048], index: 2, kind: output, shape index: {}]
  %s3 = sld [smem:[#allocation0]]
  $region18: #{tpu_custom_call.1} parent=0
    _
  %s5 = ssub.s32 1, %s3
  %s6 = scalar_select 0, %s5, %s3
  %7 = sst [smem:[#allocation3]] %s0
  $region1: #{tpu_custom_call.1} parent=0
    #allocation4 [shape = 'u8[8192]{0}', space=vmem, size = 0x2000, scoped, tag = 'input window, operand 1, single buffered']
    #allocation5 [shape = 's32[1]{0}', space=sflag, size = 0x4, scoped, tag = 'scoped memory for tpu_custom_call.1']
    #allocation6 [shape = 's32[1]{0}', space=sflag, size = 0x4, scoped, tag = 'scoped memory for tpu_custom_call.1']
    #allocation7 [shape = 'u8[8192]{0}', space=vmem, size = 0x2000, scoped, tag = 'output window, operand 0, single buffered']
    %8 = vsyncpa [#allocation5], 0
    %9 = vsyncpa [#allocation6], 0
    // Predicated region
    $region2: #{tpu_custom_call.1} parent=1 // pred_check
      _
    $region3: #{tpu_custom_call.1} parent=1 // pred_check_branch
      %11 = sbr.rel (0) target = $region5
    $region4: #{tpu_custom_call.1} parent=1 // pred_region
      %13 = vsyncadd [#allocation5], 0
      %s15 = sshll.u32 %s1, 4
      %s16 = int_to_ptr.hbm [resolvable:$true] %s15
      %s17 = sshll.u32 [#allocation4], 4
      %s18 = int_to_ptr.vmem [resolvable:$true] %s17
      %20 = dma.hbm_to_vmem [thread:$0]  %s16, 256, %s18, [#allocation5]
    $region5: #{tpu_custom_call.1} parent=1 // pred_fallthru
      _
    // Predicated region
    $region6: #{tpu_custom_call.1} parent=1 // pred_check
      _
    $region7: #{tpu_custom_call.1} parent=1 // pred_check_branch
      %22 = sbr.rel (0) target = $region9
    $region8: #{tpu_custom_call.1} parent=1 // pred_region
      %24 = dma.done [#allocation5], 256
    $region9: #{tpu_custom_call.1} parent=1 // pred_fallthru
      _
    %v25 = vld [vmem:[#allocation4] sm:$0xff]
    %v26 = vld [vmem:[#allocation4 + $0x8] sm:$0xff]
    %s27 = sld [smem:[#allocation3]]
    %v28 = vstv %s27
    %v29 = vmul.f32 %v25, %v28
    %v30 = vmul.f32 %v26, %v28
    %31 = vst [vmem:[#allocation7] sm:$0xff] %v29
    %32 = vst [vmem:[#allocation7 + $0x8] sm:$0xff] %v30
    // Predicated region
    $region10: #{tpu_custom_call.1} parent=1 // pred_check
      _
    $region11: #{tpu_custom_call.1} parent=1 // pred_check_branch
      %34 = sbr.rel (0) target = $region13
    $region12: #{tpu_custom_call.1} parent=1 // pred_region
      %36 = vsyncadd [#allocation6], 0
      %s38 = sshll.u32 [#allocation7], 4
      %s39 = int_to_ptr.vmem [resolvable:$true] %s38
      %s40 = sshll.u32 %s2, 4
      %s41 = int_to_ptr.hbm [resolvable:$true] %s40
      %43 = dma.vmem_to_hbm [thread:$0]  %s39, 256, %s41, [#allocation6]
    $region13: #{tpu_custom_call.1} parent=1 // pred_fallthru
      _
    // Predicated region
    $region14: #{tpu_custom_call.1} parent=1 // pred_check
      _
    $region15: #{tpu_custom_call.1} parent=1 // pred_check_branch
      %45 = sbr.rel (0) target = $region17
    $region16: #{tpu_custom_call.1} parent=1 // pred_region
      %47 = dma.done [#allocation6], 256
    $region17: #{tpu_custom_call.1} parent=1 // pred_fallthru
      _
    %48 = vsyncpa [#allocation5], 1
    %49 = vsyncpa [#allocation6], 1

</llo_original>
